<compile_context>
chip_gen: v6e
topology: v6e:2x2x1
jax: 0.10.0
libtpu: 0.0.40
codegen_flags: <defaults>
</compile_context>

<pallas_src>
import functools

import jax
import jax.numpy as jnp
import numpy as np
from jax import lax
from jax.experimental import pallas as pl
from jax.experimental.pallas import tpu as pltpu


def _qdp_kernel(z1_ref, z2_ref, tri_ref, idx_ref, cnt_ref, *, dis_z, nsample):
    # z1_ref : (1, C, NC)   f32  input-point z, chunk-major: z1m[i, c] = z1[c*C + i]
    # z2_ref : (1, 1, TM)   f32  query-point z on the lane axis
    # tri_ref: (C, C)       bf16 lower-triangular ones (inclusive-scan matrix)
    # idx_ref: (1, nsample, TM) i32  lane-dense output
    # cnt_ref: (1, 1, TM)       i32  lane-dense output
    _, chunk, num_chunks = z1_ref.shape
    z1m = z1_ref[0]                       # (C, NC)
    z2 = z2_ref[0]                        # (1, TM)
    tri = tri_ref[...]                    # (C, C) bf16
    tm = z2.shape[-1]

    offset = jnp.zeros((1, tm), jnp.float32)                  # running #matches per query
    cols = [jnp.zeros((1, tm), jnp.float32) for _ in range(nsample)]

    # Streaming pass over the input points, one chunk at a time (static unroll).
    for c in range(num_chunks):
        z1c = z1m[:, c:c + 1]                                  # (C, 1)
        match = jnp.abs(z1c - z2) < dis_z                      # (C, TM) bool
        m_bf = match.astype(jnp.bfloat16)                      # exact 0/1 in bf16
        # Inclusive prefix sum along the point (sublane) axis on the MXU:
        local = jnp.dot(tri, m_bf, preferred_element_type=jnp.float32)  # (C, TM)
        g = local + offset                                     # global inclusive csum
        offset = g[chunk - 1:chunk, :]                         # new running total (last row)
        # idx[j, s] = #{k : csum[j, k] <= s}; accumulate the per-chunk counts.
        for s in range(nsample):
            le = (g <= jnp.float32(s)).astype(jnp.float32)
            cols[s] = cols[s] + jnp.sum(le, axis=0, keepdims=True)

    cnt = jnp.minimum(offset, jnp.float32(nsample)).astype(jnp.int32)   # (1, TM)
    idx_mat = jnp.concatenate(cols, axis=0).astype(jnp.int32)           # (nsample, TM)
    # CUDA semantics: first match pre-fills all slots; rows with no match stay 0.
    first = jnp.where(cnt > 0, idx_mat[0:1, :], 0)                      # (1, TM)
    slots = lax.broadcasted_iota(jnp.int32, (nsample, tm), 0)
    idx_ref[0] = jnp.where(slots < cnt, idx_mat, first)
    cnt_ref[0] = cnt


def _round_up(x, m):
    return (x + m - 1) // m * m


def _pick_m_tile(mp, batch):
    """M-tile: multiple-of-128 divisor of mp (mp is a multiple of 128), cap 512.

    Prefer the largest tile that still yields >= 2 total grid steps so both v7x
    TensorCores get work even at batch=1.
    """
    units = mp // 128
    best = 1
    for t in (4, 3, 2, 1):
        if units % t == 0 and (batch * (units // t) >= 2 or t == 1):
            best = t
            break
    return best * 128


def query_depth_point(xyz1, xyz2, dis_z, nsample):
    """xyz1: (B,3,N) f32, xyz2: (B,3,M) f32 -> idx (B,M,nsample) i32, pts_cnt (B,M) i32."""
    B, c1, N = xyz1.shape
    B2, c2, M = xyz2.shape
    assert B == B2 and c1 == 3 and c2 == 3
    nsample = int(nsample)
    dis_z = float(dis_z)

    chunk = 128 if N <= 128 else 256          # intra-chunk scan width (MXU matmul size)
    n_pad = _round_up(N, chunk)
    num_chunks = n_pad // chunk
    m_pad = _round_up(M, 128)
    tm = _pick_m_tile(m_pad, B)

    z1 = xyz1[:, 2, :]                        # only the depth channel matters
    z2 = xyz2[:, 2, :]
    # Sentinel padding: padded input points can never match any query.
    z1p = jnp.pad(z1, ((0, 0), (0, n_pad - N)), constant_values=1e30)
    z2p = jnp.pad(z2, ((0, 0), (0, m_pad - M)))
    z1c = jnp.swapaxes(z1p.reshape(B, num_chunks, chunk), 1, 2)   # (B, chunk, num_chunks)
    z2p = z2p.reshape(B, 1, m_pad)
    tri = jnp.tril(jnp.ones((chunk, chunk), jnp.bfloat16))        # inclusive-scan matrix

    kernel = functools.partial(_qdp_kernel, dis_z=dis_z, nsample=nsample)

    idx, cnt = pl.pallas_call(
        kernel,
        grid=(B, m_pad // tm),
        in_specs=[
            pl.BlockSpec((1, chunk, num_chunks), lambda b, mt: (b, 0, 0)),
            pl.BlockSpec((1, 1, tm), lambda b, mt: (b, 0, mt)),
            pl.BlockSpec((chunk, chunk), lambda b, mt: (0, 0)),
        ],
        out_specs=[
            pl.BlockSpec((1, nsample, tm), lambda b, mt: (b, 0, mt)),
            pl.BlockSpec((1, 1, tm), lambda b, mt: (b, 0, mt)),
        ],
        out_shape=(
            jax.ShapeDtypeStruct((B, nsample, m_pad), jnp.int32),
            jax.ShapeDtypeStruct((B, 1, m_pad), jnp.int32),
        ),
        compiler_params=pltpu.CompilerParams(
            dimension_semantics=("parallel", "parallel"),
        ),
    )(z1c, z2p, tri)

    idx = jnp.transpose(idx[:, :, :M], (0, 2, 1))   # (B, M, nsample)
    cnt = cnt[:, 0, :M]                             # (B, M)
    return idx, cnt


class QueryDepthPoint:
    """JAX/Pallas equivalent of the PyTorch QueryDepthPoint module (no learned params)."""

    def __init__(self, dis_z, nsample):
        self.dis_z = float(dis_z)
        self.nsample = int(nsample)

    def __call__(self, xyz1, xyz2):
        return query_depth_point(xyz1, xyz2, self.dis_z, self.nsample)


def _reference(dis_z, nsample, xyz1, xyz2):
    """Pure-numpy re-implementation of the CUDA kernel semantics."""
    x1 = np.transpose(np.asarray(xyz1, np.float32), (0, 2, 1))  # (B, N, 3)
    x2 = np.transpose(np.asarray(xyz2, np.float32), (0, 2, 1))  # (B, M, 3)
    B, N, _ = x1.shape
    M = x2.shape[1]
    idx = np.zeros((B, M, nsample), np.int32)
    cnt = np.zeros((B, M), np.int32)
    for b in range(B):
        for j in range(M):
            c = 0
            for k in range(N):
                if c == nsample:
                    break
                d = np.abs(np.float32(x2[b, j, 2]) - np.float32(x1[b, k, 2]))
                if d < np.float32(dis_z):
                    if c == 0:
                        idx[b, j, :] = k
                    idx[b, j, c] = k
                    c += 1
            cnt[b, j] = c
    return idx, cnt


if __name__ == "__main__":
    key = jax.random.PRNGKey(0)
    B, N, M = 2, 128, 64
    dis_z, nsample = 0.3, 8

    k1, k2 = jax.random.split(key)
    xyz1 = jax.random.uniform(k1, (B, 3, N), dtype=jnp.float32)   # input points
    xyz2 = jax.random.uniform(k2, (B, 3, M), dtype=jnp.float32)   # query points

    mod = QueryDepthPoint(dis_z, nsample)
    idx, pts_cnt = mod(xyz1, xyz2)
    jax.block_until_ready((idx, pts_cnt))

    ref_idx, ref_cnt = _reference(dis_z, nsample, xyz1, xyz2)
    np.testing.assert_array_equal(np.asarray(idx), ref_idx)
    np.testing.assert_array_equal(np.asarray(pts_cnt), ref_cnt)

    print("KERNEL_OK")
</pallas_src>

<mosaic_0001>
module attributes {stable_mosaic.version = 11 : i64} {
  func.func @_qdp_kernel(%arg0: i32, %arg1: i32, %arg2: memref<1x128x1xf32, #tpu.memory_space<vmem>>, %arg3: memref<1x1x128xf32, #tpu.memory_space<vmem>>, %arg4: memref<128x128xbf16, #tpu.memory_space<vmem>>, %arg5: memref<1x8x128xi32, #tpu.memory_space<vmem>>, %arg6: memref<1x1x128xi32, #tpu.memory_space<vmem>>) attributes {dimension_semantics = [#tpu.dimension_semantics<parallel>, #tpu.dimension_semantics<parallel>], iteration_bounds = array<i64: 2, 1>, scalar_prefetch = 0 : i64, scratch_operands = 0 : i64, tpu.core_type = #tpu.core_type<tc>, window_params = [{transform_indices = @transform_0, window_bounds = array<i64: 1, 128, 1>}, {transform_indices = @transform_1, window_bounds = array<i64: 1, 1, 128>}, {pipeline_mode = #tpu.pipeline_mode<synchronous>, transform_indices = @transform_2, window_bounds = array<i64: 128, 128>}, {transform_indices = @transform_3, window_bounds = array<i64: 1, 8, 128>}, {transform_indices = @transform_4, window_bounds = array<i64: 1, 1, 128>}]} {
    %c0 = arith.constant 0 : index
    %c0_0 = arith.constant 0 : index
    %c0_1 = arith.constant 0 : index
    %0 = vector.load %arg2[%c0, %c0_0, %c0_1] : memref<1x128x1xf32, #tpu.memory_space<vmem>>, vector<1x128x1xf32>
    %1 = vector.shape_cast %0 : vector<1x128x1xf32> to vector<128x1xf32>
    %c0_2 = arith.constant 0 : index
    %c0_3 = arith.constant 0 : index
    %c0_4 = arith.constant 0 : index
    %2 = vector.load %arg3[%c0_2, %c0_3, %c0_4] : memref<1x1x128xf32, #tpu.memory_space<vmem>>, vector<1x1x128xf32>
    %3 = vector.shape_cast %2 : vector<1x1x128xf32> to vector<1x128xf32>
    %c0_5 = arith.constant 0 : index
    %c0_6 = arith.constant 0 : index
    %4 = vector.load %arg4[%c0_5, %c0_6] : memref<128x128xbf16, #tpu.memory_space<vmem>>, vector<128x128xbf16>
    %cst = arith.constant 0.000000e+00 : f32
    %5 = vector.broadcast %cst : f32 to vector<1x128xf32>
    %cst_7 = arith.constant 0.000000e+00 : f32
    %6 = vector.broadcast %cst_7 : f32 to vector<1x128xf32>
    %cst_8 = arith.constant 0.000000e+00 : f32
    %7 = vector.broadcast %cst_8 : f32 to vector<1x128xf32>
    %cst_9 = arith.constant 0.000000e+00 : f32
    %8 = vector.broadcast %cst_9 : f32 to vector<1x128xf32>
    %cst_10 = arith.constant 0.000000e+00 : f32
    %9 = vector.broadcast %cst_10 : f32 to vector<1x128xf32>
    %cst_11 = arith.constant 0.000000e+00 : f32
    %10 = vector.broadcast %cst_11 : f32 to vector<1x128xf32>
    %cst_12 = arith.constant 0.000000e+00 : f32
    %11 = vector.broadcast %cst_12 : f32 to vector<1x128xf32>
    %cst_13 = arith.constant 0.000000e+00 : f32
    %12 = vector.broadcast %cst_13 : f32 to vector<1x128xf32>
    %cst_14 = arith.constant 0.000000e+00 : f32
    %13 = vector.broadcast %cst_14 : f32 to vector<1x128xf32>
    %14 = vector.broadcast %1 : vector<128x1xf32> to vector<128x128xf32>
    %15 = vector.broadcast %3 : vector<1x128xf32> to vector<128x128xf32>
    %16 = arith.subf %14, %15 : vector<128x128xf32>
    %17 = math.absf %16 : vector<128x128xf32>
    %cst_15 = arith.constant 3.000000e-01 : f32
    %18 = vector.broadcast %cst_15 : f32 to vector<128x128xf32>
    %19 = arith.cmpf olt, %17, %18 : vector<128x128xf32>
    %20 = arith.extui %19 : vector<128x128xi1> to vector<128x128xi32>
    %21 = arith.sitofp %20 : vector<128x128xi32> to vector<128x128xf32>
    %22 = arith.truncf %21 : vector<128x128xf32> to vector<128x128xbf16>
    %cst_16 = arith.constant dense<0.000000e+00> : vector<128x128xf32>
    %23 = tpu.matmul %4, %22, %cst_16 {dimension_numbers = #tpu.dot_dimension_numbers<[1], [0], [0], [1], [0, 0, 1, 1], [], []>} : vector<128x128xbf16>, vector<128x128xbf16>, vector<128x128xf32> -> vector<128x128xf32>
    %24 = vector.broadcast %5 : vector<1x128xf32> to vector<128x128xf32>
    %25 = arith.addf %23, %24 : vector<128x128xf32>
    %26 = vector.extract_strided_slice %25 {offsets = [127, 0], sizes = [1, 128], strides = [1, 1]} : vector<128x128xf32> to vector<1x128xf32>
    %cst_17 = arith.constant 0.000000e+00 : f32
    %27 = vector.broadcast %cst_17 : f32 to vector<128x128xf32>
    %28 = arith.cmpf ole, %25, %27 : vector<128x128xf32>
    %29 = arith.extui %28 : vector<128x128xi1> to vector<128x128xi32>
    %30 = arith.sitofp %29 : vector<128x128xi32> to vector<128x128xf32>
    %cst_18 = arith.constant dense<0.000000e+00> : vector<128xf32>
    %31 = vector.multi_reduction <add>, %30, %cst_18 [0] : vector<128x128xf32> to vector<128xf32>
    %32 = vector.shape_cast %31 : vector<128xf32> to vector<1x128xf32>
    %33 = arith.addf %6, %32 : vector<1x128xf32>
    %cst_19 = arith.constant 1.000000e+00 : f32
    %34 = vector.broadcast %cst_19 : f32 to vector<128x128xf32>
    %35 = arith.cmpf ole, %25, %34 : vector<128x128xf32>
    %36 = arith.extui %35 : vector<128x128xi1> to vector<128x128xi32>
    %37 = arith.sitofp %36 : vector<128x128xi32> to vector<128x128xf32>
    %cst_20 = arith.constant dense<0.000000e+00> : vector<128xf32>
    %38 = vector.multi_reduction <add>, %37, %cst_20 [0] : vector<128x128xf32> to vector<128xf32>
    %39 = vector.shape_cast %38 : vector<128xf32> to vector<1x128xf32>
    %40 = arith.addf %7, %39 : vector<1x128xf32>
    %cst_21 = arith.constant 2.000000e+00 : f32
    %41 = vector.broadcast %cst_21 : f32 to vector<128x128xf32>
    %42 = arith.cmpf ole, %25, %41 : vector<128x128xf32>
    %43 = arith.extui %42 : vector<128x128xi1> to vector<128x128xi32>
    %44 = arith.sitofp %43 : vector<128x128xi32> to vector<128x128xf32>
    %cst_22 = arith.constant dense<0.000000e+00> : vector<128xf32>
    %45 = vector.multi_reduction <add>, %44, %cst_22 [0] : vector<128x128xf32> to vector<128xf32>
    %46 = vector.shape_cast %45 : vector<128xf32> to vector<1x128xf32>
    %47 = arith.addf %8, %46 : vector<1x128xf32>
    %cst_23 = arith.constant 3.000000e+00 : f32
    %48 = vector.broadcast %cst_23 : f32 to vector<128x128xf32>
    %49 = arith.cmpf ole, %25, %48 : vector<128x128xf32>
    %50 = arith.extui %49 : vector<128x128xi1> to vector<128x128xi32>
    %51 = arith.sitofp %50 : vector<128x128xi32> to vector<128x128xf32>
    %cst_24 = arith.constant dense<0.000000e+00> : vector<128xf32>
    %52 = vector.multi_reduction <add>, %51, %cst_24 [0] : vector<128x128xf32> to vector<128xf32>
    %53 = vector.shape_cast %52 : vector<128xf32> to vector<1x128xf32>
    %54 = arith.addf %9, %53 : vector<1x128xf32>
    %cst_25 = arith.constant 4.000000e+00 : f32
    %55 = vector.broadcast %cst_25 : f32 to vector<128x128xf32>
    %56 = arith.cmpf ole, %25, %55 : vector<128x128xf32>
    %57 = arith.extui %56 : vector<128x128xi1> to vector<128x128xi32>
    %58 = arith.sitofp %57 : vector<128x128xi32> to vector<128x128xf32>
    %cst_26 = arith.constant dense<0.000000e+00> : vector<128xf32>
    %59 = vector.multi_reduction <add>, %58, %cst_26 [0] : vector<128x128xf32> to vector<128xf32>
    %60 = vector.shape_cast %59 : vector<128xf32> to vector<1x128xf32>
    %61 = arith.addf %10, %60 : vector<1x128xf32>
    %cst_27 = arith.constant 5.000000e+00 : f32
    %62 = vector.broadcast %cst_27 : f32 to vector<128x128xf32>
    %63 = arith.cmpf ole, %25, %62 : vector<128x128xf32>
    %64 = arith.extui %63 : vector<128x128xi1> to vector<128x128xi32>
    %65 = arith.sitofp %64 : vector<128x128xi32> to vector<128x128xf32>
    %cst_28 = arith.constant dense<0.000000e+00> : vector<128xf32>
    %66 = vector.multi_reduction <add>, %65, %cst_28 [0] : vector<128x128xf32> to vector<128xf32>
    %67 = vector.shape_cast %66 : vector<128xf32> to vector<1x128xf32>
    %68 = arith.addf %11, %67 : vector<1x128xf32>
    %cst_29 = arith.constant 6.000000e+00 : f32
    %69 = vector.broadcast %cst_29 : f32 to vector<128x128xf32>
    %70 = arith.cmpf ole, %25, %69 : vector<128x128xf32>
    %71 = arith.extui %70 : vector<128x128xi1> to vector<128x128xi32>
    %72 = arith.sitofp %71 : vector<128x128xi32> to vector<128x128xf32>
    %cst_30 = arith.constant dense<0.000000e+00> : vector<128xf32>
    %73 = vector.multi_reduction <add>, %72, %cst_30 [0] : vector<128x128xf32> to vector<128xf32>
    %74 = vector.shape_cast %73 : vector<128xf32> to vector<1x128xf32>
    %75 = arith.addf %12, %74 : vector<1x128xf32>
    %cst_31 = arith.constant 7.000000e+00 : f32
    %76 = vector.broadcast %cst_31 : f32 to vector<128x128xf32>
    %77 = arith.cmpf ole, %25, %76 : vector<128x128xf32>
    %78 = arith.extui %77 : vector<128x128xi1> to vector<128x128xi32>
    %79 = arith.sitofp %78 : vector<128x128xi32> to vector<128x128xf32>
    %cst_32 = arith.constant dense<0.000000e+00> : vector<128xf32>
    %80 = vector.multi_reduction <add>, %79, %cst_32 [0] : vector<128x128xf32> to vector<128xf32>
    %81 = vector.shape_cast %80 : vector<128xf32> to vector<1x128xf32>
    %82 = arith.addf %13, %81 : vector<1x128xf32>
    %cst_33 = arith.constant 8.000000e+00 : f32
    %83 = vector.broadcast %cst_33 : f32 to vector<1x128xf32>
    %84 = arith.minimumf %26, %83 : vector<1x128xf32>
    %85 = arith.fptosi %84 : vector<1x128xf32> to vector<1x128xi32>
    %86 = tpu.concatenate %33, %40, %47, %54, %61, %68, %75, %82 in 0 : vector<1x128xf32>, vector<1x128xf32>, vector<1x128xf32>, vector<1x128xf32>, vector<1x128xf32>, vector<1x128xf32>, vector<1x128xf32>, vector<1x128xf32> -> vector<8x128xf32>
    %87 = arith.fptosi %86 : vector<8x128xf32> to vector<8x128xi32>
    %c0_i32 = arith.constant 0 : i32
    %88 = vector.broadcast %c0_i32 : i32 to vector<1x128xi32>
    %89 = arith.cmpi sgt, %85, %88 : vector<1x128xi32>
    %90 = vector.extract_strided_slice %87 {offsets = [0, 0], sizes = [1, 128], strides = [1, 1]} : vector<8x128xi32> to vector<1x128xi32>
    %c0_i32_34 = arith.constant 0 : i32
    %91 = vector.broadcast %c0_i32_34 : i32 to vector<1x128xi32>
    %92 = arith.select %89, %90, %91 : vector<1x128xi1>, vector<1x128xi32>
    %93 = tpu.iota {dimensions = array<i32: 0>} : vector<8x128xi32>
    %94 = vector.broadcast %85 : vector<1x128xi32> to vector<8x128xi32>
    %95 = arith.cmpi slt, %93, %94 : vector<8x128xi32>
    %96 = vector.shape_cast %92 : vector<1x128xi32> to vector<1x128xi32>
    %97 = vector.broadcast %96 : vector<1x128xi32> to vector<8x128xi32>
    %98 = arith.select %95, %87, %97 : vector<8x128xi1>, vector<8x128xi32>
    %c0_35 = arith.constant 0 : index
    %c0_36 = arith.constant 0 : index
    %c0_37 = arith.constant 0 : index
    %99 = vector.load %arg5[%c0_35, %c0_36, %c0_37] : memref<1x8x128xi32, #tpu.memory_space<vmem>>, vector<1x8x128xi32>
    %100 = vector.shape_cast %99 : vector<1x8x128xi32> to vector<8x128xi32>
    %101 = vector.shape_cast %98 : vector<8x128xi32> to vector<1x8x128xi32>
    tpu.vector_store %arg5[%c0_35, %c0_36, %c0_37], %101 {strides = array<i32>} : memref<1x8x128xi32, #tpu.memory_space<vmem>>, vector<1x8x128xi32>,
    %c0_38 = arith.constant 0 : index
    %c0_39 = arith.constant 0 : index
    %c0_40 = arith.constant 0 : index
    %102 = vector.load %arg6[%c0_38, %c0_39, %c0_40] : memref<1x1x128xi32, #tpu.memory_space<vmem>>, vector<1x1x128xi32>
    %103 = vector.shape_cast %102 : vector<1x1x128xi32> to vector<1x128xi32>
    %104 = vector.shape_cast %85 : vector<1x128xi32> to vector<1x1x128xi32>
    tpu.vector_store %arg6[%c0_38, %c0_39, %c0_40], %104 {strides = array<i32>} : memref<1x1x128xi32, #tpu.memory_space<vmem>>, vector<1x1x128xi32>,
    return
  }
  func.func @transform_0(%arg0: i32, %arg1: i32) -> (i32, i32, i32) {
    %c0_i32 = arith.constant 0 : i32
    %c0_i32_0 = arith.constant 0 : i32
    %c0_i32_1 = arith.constant 0 : i32
    return %arg0, %c0_i32, %c0_i32_0 : i32, i32, i32
  }
  func.func @transform_1(%arg0: i32, %arg1: i32) -> (i32, i32, i32) {
    %c0_i32 = arith.constant 0 : i32
    %c0_i32_0 = arith.constant 0 : i32
    return %arg0, %c0_i32, %arg1 : i32, i32, i32
  }
  func.func @transform_2(%arg0: i32, %arg1: i32) -> (i32, i32) {
    %c0_i32 = arith.constant 0 : i32
    %c0_i32_0 = arith.constant 0 : i32
    %c0_i32_1 = arith.constant 0 : i32
    return %c0_i32, %c0_i32_0 : i32, i32
  }
  func.func @transform_3(%arg0: i32, %arg1: i32) -> (i32, i32, i32) {
    %c0_i32 = arith.constant 0 : i32
    %c0_i32_0 = arith.constant 0 : i32
    return %arg0, %c0_i32, %arg1 : i32, i32, i32
  }
  func.func @transform_4(%arg0: i32, %arg1: i32) -> (i32, i32, i32) {
    %c0_i32 = arith.constant 0 : i32
    %c0_i32_0 = arith.constant 0 : i32
    return %arg0, %c0_i32, %arg1 : i32, i32, i32
  }
}

</mosaic_0001>

<llo_original>
// kernel: tpu_custom_call.1
$region0: #{tpu_custom_call.1}
  #allocation0 [shape = 'u32[]', space=smem, size = 0x4, offset = 0x4, fixed_abs, tag = 'smem constant byte address 0x4 - core index']
  #allocation1 [shape = 'u32[144,128]{1,0:T(1,128)}', space=vmem, size = 0x12000, scoped, tag = 'internal scratch']
  %s0 = inlined_call_operand.vmem [shape: f32[2,128,1], index: 0, kind: input, shape index: {}]
  %s1 = inlined_call_operand.vmem [shape: f32[2,1,128], index: 1, kind: input, shape index: {}]
  %s2 = inlined_call_operand.vmem [shape: bf16[128,128], index: 2, kind: input, shape index: {}]
  %s3 = inlined_call_operand.hbm [shape: s32[2,8,128], index: 3, kind: output, shape index: {0}]
  %s4 = inlined_call_operand.hbm [shape: s32[2,1,128], index: 4, kind: output, shape index: {1}]
  %5 = xla_tuple %s3, %s4
  %s6 = sld [smem:[#allocation0]]
  $region53: #{tpu_custom_call.1} parent=0
    _
  %s8 = ssub.s32 1, %s6
  %s9 = scalar_select 0, %s8, %s6
  $region1: #{tpu_custom_call.1} parent=0
    #allocation2 [shape = 'u8[8192]{0}', space=vmem, size = 0x2000, scoped, tag = 'output window, operand 0']
    #allocation3 [shape = 's32[2]{0}', space=sflag, size = 0x8, scoped, tag = 'scoped memory for tpu_custom_call.1']
    #allocation4 [shape = 'u8[1024]{0}', space=vmem, size = 0x400, scoped, tag = 'output window, operand 1']
    #allocation5 [shape = 's32[2]{0}', space=sflag, size = 0x8, scoped, tag = 'scoped memory for tpu_custom_call.1']
    %10 = vsyncpa [#allocation3], 0
    %s11 = scalar_lea.sflag [#allocation3], 1
    %12 = vsyncpa %s11, 0
    %13 = vsyncpa [#allocation5], 0
    %s14 = scalar_lea.sflag [#allocation5], 1
    %15 = vsyncpa %s14, 0
    loop: start=0, step=1, limit=4
    $region2: #{tpu_custom_call.1} parent=1 // loop_pre_header
      _
    $region3: #{tpu_custom_call.1} parent=1 // loop_header
      %s17 = sphi 0, %s21
      %p18 = scmp.ge.s32.totalorder %s17, 4
      %s24 = sphi 0, %s36
      %s25 = sphi 0, %s32
      %s26 = sphi 0, %s24
      %s27 = sphi 0, %s25
      %s28 = sphi 0, %s26
      %s29 = sphi 0, %s27
      %s39 = sphi 0, %s41
      %s42 = sphi 0, %s39
      %s43 = sphi 0, %s42
      %s59 = sphi 0, %s43
      %s67 = sphi 0, %s69
      %s70 = sphi 0, %s67
      %s71 = sphi 0, %s70
      %s87 = sphi 0, %s71
      %s91 = sphi 0, %s91
      %s93 = sphi 0, %s91
      %s94 = sphi 0, %s93
      %s108 = sphi 0, %s94
      %s116 = sphi 0, %s118
      %s119 = sphi 0, %s116
      %s120 = sphi 0, %s119
      %s136 = sphi 0, %s120
      %s144 = sphi 0, %s146
      %s147 = sphi 0, %s144
      %s148 = sphi 0, %s147
      %s164 = sphi 0, %s148
    $region4: #{tpu_custom_call.1} parent=1 // loop_header_branch
      %20 = sbr.rel (%p18) target = $region8
    $region5: #{tpu_custom_call.1} parent=1 // loop_body
      %s22 = ssub.s32 %s17, 1
      %s23 = ssub.s32 %s17, 2
      %s30 = sadd.s32 1, %s25
      %p31 = scmp.ge.s32.totalorder %s30, 1
      %s32 = scalar_select %p31, 0, %s30
      %s33 = sadd.s32 1, %s24
      %s34 = scalar_select %p31, %s33, %s24
      %p35 = scmp.ge.s32.totalorder %s34, 2
      %s36 = scalar_select %p35, 0, %s34
      %s37 = ssub.s32 %s24, %s36
      %p38 = scmp.eq.s32.totalorder %s37, 0
      %s40 = sadd.s32 %s39, 1
      %s41 = scalar_select %p38, %s39, %s40
      %p44 = pneg %p38
      %p45 = scmp.eq.s32.totalorder %s17, 1
      %p46 = por %p44, %p45
      %p47 = scmp.ne.s32.totalorder %s39, %s42
      %p48 = scmp.eq.s32.totalorder %s17, 0
      %p49 = por %p47, %p48
      %p50 = scmp.ne.s32.totalorder %s39, %s42
      %p51 = scmp.eq.s32.totalorder %s22, 1
      %p52 = por %p50, %p51
      %p53 = scmp.ne.s32.totalorder %s42, %s43
      %p54 = scmp.eq.s32.totalorder %s22, 0
      %p55 = por %p53, %p54
      %p56 = scmp.ne.s32.totalorder %s42, %s43
      %p57 = scmp.eq.s32.totalorder %s23, 1
      %p58 = por %p56, %p57
      %p60 = scmp.ne.s32.totalorder %s43, %s59
      %p61 = scmp.eq.s32.totalorder %s23, 0
      %p62 = por %p60, %p61
      %s63 = ssub.s32 %s24, %s36
      %s64 = ssub.s32 %s25, %s32
      %s65 = sor.u32 %s63, %s64
      %p66 = scmp.eq.s32.totalorder %s65, 0
      %s68 = sadd.s32 %s67, 1
      %s69 = scalar_select %p66, %s67, %s68
      %p72 = pneg %p66
      %p73 = scmp.eq.s32.totalorder %s17, 1
      %p74 = por %p72, %p73
      %p75 = scmp.ne.s32.totalorder %s67, %s70
      %p76 = scmp.eq.s32.totalorder %s17, 0
      %p77 = por %p75, %p76
      %p78 = scmp.ne.s32.totalorder %s67, %s70
      %p79 = scmp.eq.s32.totalorder %s22, 1
      %p80 = por %p78, %p79
      %p81 = scmp.ne.s32.totalorder %s70, %s71
      %p82 = scmp.eq.s32.totalorder %s22, 0
      %p83 = por %p81, %p82
      %p84 = scmp.ne.s32.totalorder %s70, %s71
      %p85 = scmp.eq.s32.totalorder %s23, 1
      %p86 = por %p84, %p85
      %p88 = scmp.ne.s32.totalorder %s71, %s87
      %p89 = scmp.eq.s32.totalorder %s23, 0
      %p90 = por %p88, %p89
      %s92 = sadd.s32 %s91, 1
      %p95 = scmp.eq.s32.totalorder %s17, 1
      %p96 = scmp.ne.s32.totalorder %s91, %s93
      %p97 = scmp.eq.s32.totalorder %s17, 0
      %p98 = por %p96, %p97
      %p99 = scmp.ne.s32.totalorder %s91, %s93
      %p100 = scmp.eq.s32.totalorder %s22, 1
      %p101 = por %p99, %p100
      %p102 = scmp.ne.s32.totalorder %s93, %s94
      %p103 = scmp.eq.s32.totalorder %s22, 0
      %p104 = por %p102, %p103
      %p105 = scmp.ne.s32.totalorder %s93, %s94
      %p106 = scmp.eq.s32.totalorder %s23, 1
      %p107 = por %p105, %p106
      %p109 = scmp.ne.s32.totalorder %s94, %s108
      %p110 = scmp.eq.s32.totalorder %s23, 0
      %p111 = por %p109, %p110
      %s112 = ssub.s32 %s24, %s36
      %s113 = ssub.s32 %s25, %s32
      %s114 = sor.u32 %s112, %s113
      %p115 = scmp.eq.s32.totalorder %s114, 0
      %s117 = sadd.s32 %s116, 1
      %s118 = scalar_select %p115, %s116, %s117
      %p121 = pneg %p115
      %p122 = scmp.eq.s32.totalorder %s17, 1
      %p123 = por %p121, %p122
      %p124 = scmp.ne.s32.totalorder %s116, %s119
      %p125 = scmp.eq.s32.totalorder %s17, 0
      %p126 = por %p124, %p125
      %p127 = scmp.ne.s32.totalorder %s116, %s119
      %p128 = scmp.eq.s32.totalorder %s22, 1
      %p129 = por %p127, %p128
      %p130 = scmp.ne.s32.totalorder %s119, %s120
      %p131 = scmp.eq.s32.totalorder %s22, 0
      %p132 = por %p130, %p131
      %p133 = scmp.ne.s32.totalorder %s119, %s120
      %p134 = scmp.eq.s32.totalorder %s23, 1
      %p135 = por %p133, %p134
      %p137 = scmp.ne.s32.totalorder %s120, %s136
      %p138 = scmp.eq.s32.totalorder %s23, 0
      %p139 = por %p137, %p138
      %s140 = ssub.s32 %s24, %s36
      %s141 = ssub.s32 %s25, %s32
      %s142 = sor.u32 %s140, %s141
      %p143 = scmp.eq.s32.totalorder %s142, 0
      %s145 = sadd.s32 %s144, 1
      %s146 = scalar_select %p143, %s144, %s145
      %p149 = pneg %p143
      %p150 = scmp.eq.s32.totalorder %s17, 1
      %p151 = por %p149, %p150
      %p152 = scmp.ne.s32.totalorder %s144, %s147
      %p153 = scmp.eq.s32.totalorder %s17, 0
      %p154 = por %p152, %p153
      %p155 = scmp.ne.s32.totalorder %s144, %s147
      %p156 = scmp.eq.s32.totalorder %s22, 1
      %p157 = por %p155, %p156
      %p158 = scmp.ne.s32.totalorder %s147, %s148
      %p159 = scmp.eq.s32.totalorder %s22, 0
      %p160 = por %p158, %p159
      %p161 = scmp.ne.s32.totalorder %s147, %s148
      %p162 = scmp.eq.s32.totalorder %s23, 1
      %p163 = por %p161, %p162
      %p165 = scmp.ne.s32.totalorder %s148, %s164
      %p166 = scmp.eq.s32.totalorder %s23, 0
      %p167 = por %p165, %p166
      %p168 = scmp.le.s32.totalorder 1, %s17
      %p169 = scmp.lt.s32.totalorder %s17, 3
      %p170 = pnand %p168, %p169
      %p171 = pneg %p170
      // Predicated region
      $region9: #{tpu_custom_call.1} parent=5 // pred_check
        _
      $region10: #{tpu_custom_call.1} parent=5 // pred_check_branch
        %173 = sbr.rel (%p170) target = $region12
      $region11: #{tpu_custom_call.1} parent=5 // pred_region
        %s174 = ssub.s32 %s17, 1
        // Predicated region
        $region13: #{tpu_custom_call.1} parent=11 // pred_check
          %p175 = pneg %p104
        $region14: #{tpu_custom_call.1} parent=11 // pred_check_branch
          %177 = sbr.rel (%p175) target = $region16
        $region15: #{tpu_custom_call.1} parent=11 // pred_region
          _
        $region16: #{tpu_custom_call.1} parent=11 // pred_fallthru
          _
      $region12: #{tpu_custom_call.1} parent=5 // pred_fallthru
        _
      %p178 = scmp.lt.s32.totalorder %s17, 2
      // Predicated region
      $region17: #{tpu_custom_call.1} parent=5 // pred_check
        %p179 = pneg %p178
      $region18: #{tpu_custom_call.1} parent=5 // pred_check_branch
        %181 = sbr.rel (%p179) target = $region20
      $region19: #{tpu_custom_call.1} parent=5 // pred_region
        // Predicated region
        $region21: #{tpu_custom_call.1} parent=19 // pred_check
          %p182 = pneg %p49
        $region22: #{tpu_custom_call.1} parent=19 // pred_check_branch
          %184 = sbr.rel (%p182) target = $region24
        $region23: #{tpu_custom_call.1} parent=19 // pred_region
          %p185 = scmp.lt.s32.totalorder %s24, 1
          %s186 = scalar_select %p185, %s24, 1
          %s187 = smul.addr %s186, 16
          %s188 = smul.addr %s187, 8
          %s189 = scalar_lea.vmem %s0, %s188
        $region24: #{tpu_custom_call.1} parent=19 // pred_fallthru
          _
        // Predicated region
        $region25: #{tpu_custom_call.1} parent=19 // pred_check
          %p190 = pneg %p77
        $region26: #{tpu_custom_call.1} parent=19 // pred_check_branch
          %192 = sbr.rel (%p190) target = $region28
        $region27: #{tpu_custom_call.1} parent=19 // pred_region
          %p193 = scmp.lt.s32.totalorder %s24, 1
          %s194 = scalar_select %p193, %s24, 1
          %p195 = scmp.lt.s32.totalorder %s25, 0
          %s196 = scalar_select %p195, %s25, 0
          %s197 = sadd.s32 %s196, %s194
          %s198 = scalar_lea.vmem %s1, %s197
        $region28: #{tpu_custom_call.1} parent=19 // pred_fallthru
          _
      $region20: #{tpu_custom_call.1} parent=5 // pred_fallthru
        _
      %p199 = scmp.le.s32.totalorder 1, %s17
      %p200 = scmp.lt.s32.totalorder %s17, 3
      %p201 = pnand %p199, %p200
      %p202 = pneg %p201
      // Predicated region
      $region29: #{tpu_custom_call.1} parent=5 // pred_check
        _
      $region30: #{tpu_custom_call.1} parent=5 // pred_check_branch
        %204 = sbr.rel (%p201) target = $region32
      $region31: #{tpu_custom_call.1} parent=5 // pred_region
        %s205 = ssub.s32 %s17, 1
        %p206 = scmp.lt.s32.totalorder %s26, 1
        %s207 = scalar_select %p206, %s26, 1
        %s208 = smul.addr %s207, 16
        %s209 = smul.addr %s208, 8
        %s210 = scalar_lea.vmem %s0, %s209
        %p211 = pneg %p55
        %p212 = pneg %p52
        %p213 = scmp.lt.s32.totalorder %s26, 1
        %s214 = scalar_select %p213, %s26, 1
        %p215 = scmp.lt.s32.totalorder %s27, 0
        %s216 = scalar_select %p215, %s27, 0
        %s217 = sadd.s32 %s216, %s214
        %s218 = scalar_lea.vmem %s1, %s217
        %p219 = pneg %p83
        %p220 = pneg %p80
        %p221 = pneg %p104
        %p222 = pneg %p101
        %p223 = pneg %p132
        %p224 = pneg %p129
        %s225 = sand.u32 %s119, 1
        %s226 = scalar_lea.sflag [#allocation3], %s225
        %s227 = sand.u32 %s119, 1
        %s228 = smul.addr %s227, 8
        %s229 = scalar_lea.vmem [#allocation2], %s228
        %p230 = pneg %p160
        %p231 = pneg %p157
        %s232 = sand.u32 %s147, 1
        %s233 = scalar_lea.sflag [#allocation5], %s232
        %s234 = sand.u32 %s147, 1
        %s235 = scalar_lea.vmem [#allocation4], %s234
        %p236 = scmp.lt.s32.totalorder %s26, 1
        %s237 = scalar_select %p236, %s26, 1
        %s238 = smul.addr %s237, 16
        %s239 = smul.addr %s238, 8
        %s240 = scalar_lea.vmem %s0, %s239
        %p241 = scmp.lt.s32.totalorder %s26, 1
        %s242 = scalar_select %p241, %s26, 1
        %p243 = scmp.lt.s32.totalorder %s27, 0
        %s244 = scalar_select %p243, %s27, 0
        %s245 = sadd.s32 %s244, %s242
        %s246 = scalar_lea.vmem %s1, %s245
        %v248 = vld [vmem:[%s240] sm:$0xff]
        %v249 = vld [vmem:[%s240 + $0x8] sm:$0xff]
        %v250 = vld [vmem:[%s240 + $0x10] sm:$0xff]
        %v251 = vld [vmem:[%s240 + $0x18] sm:$0xff]
        %v252 = vld [vmem:[%s240 + $0x20] sm:$0xff]
        %v253 = vld [vmem:[%s240 + $0x28] sm:$0xff]
        %v254 = vld [vmem:[%s240 + $0x30] sm:$0xff]
        %v255 = vld [vmem:[%s240 + $0x38] sm:$0xff]
        %v256 = vld [vmem:[%s240 + $0x40] sm:$0xff]
        %v257 = vld [vmem:[%s240 + $0x48] sm:$0xff]
        %v258 = vld [vmem:[%s240 + $0x50] sm:$0xff]
        %v259 = vld [vmem:[%s240 + $0x58] sm:$0xff]
        %v260 = vld [vmem:[%s240 + $0x60] sm:$0xff]
        %v261 = vld [vmem:[%s240 + $0x68] sm:$0xff]
        %v262 = vld [vmem:[%s240 + $0x70] sm:$0xff]
        %v263 = vld [vmem:[%s240 + $0x78] sm:$0xff]
        %v264 = vld [vmem:[%s246] sm:$0x1]
        %v265 = vld [vmem:[%s2] sm:$0xf]
        %v266 = vld [vmem:[%s2 + $0x4] sm:$0xf]
        %v267 = vld [vmem:[%s2 + $0x8] sm:$0xf]
        %v268 = vld [vmem:[%s2 + $0xc] sm:$0xf]
        %v269 = vld [vmem:[%s2 + $0x10] sm:$0xf]
        %v270 = vld [vmem:[%s2 + $0x14] sm:$0xf]
        %v271 = vld [vmem:[%s2 + $0x18] sm:$0xf]
        %v272 = vld [vmem:[%s2 + $0x1c] sm:$0xf]
        %v273 = vld [vmem:[%s2 + $0x20] sm:$0xf]
        %v274 = vld [vmem:[%s2 + $0x24] sm:$0xf]
        %v275 = vld [vmem:[%s2 + $0x28] sm:$0xf]
        %v276 = vld [vmem:[%s2 + $0x2c] sm:$0xf]
        %v277 = vld [vmem:[%s2 + $0x30] sm:$0xf]
        %v278 = vld [vmem:[%s2 + $0x34] sm:$0xf]
        %v279 = vld [vmem:[%s2 + $0x38] sm:$0xf]
        %v280 = vld [vmem:[%s2 + $0x3c] sm:$0xf]
        %282 = vset.pattern.permute.xlu0 0
        %283 = vperm.xlu0 %282, %v248
        %v284 = vpop.permute.xlu0 %283
        %287 = vset.pattern.permute.xlu0 0
        %288 = vperm.xlu0 %287, %v249
        %v289 = vpop.permute.xlu0 %288
        %292 = vset.pattern.permute.xlu0 0
        %293 = vperm.xlu0 %292, %v250
        %v294 = vpop.permute.xlu0 %293
        %297 = vset.pattern.permute.xlu0 0
        %298 = vperm.xlu0 %297, %v251
        %v299 = vpop.permute.xlu0 %298
        %302 = vset.pattern.permute.xlu0 0
        %303 = vperm.xlu0 %302, %v252
        %v304 = vpop.permute.xlu0 %303
        %307 = vset.pattern.permute.xlu0 0
        %308 = vperm.xlu0 %307, %v253
        %v309 = vpop.permute.xlu0 %308
        %312 = vset.pattern.permute.xlu0 0
        %313 = vperm.xlu0 %312, %v254
        %v314 = vpop.permute.xlu0 %313
        %317 = vset.pattern.permute.xlu0 0
        %318 = vperm.xlu0 %317, %v255
        %v319 = vpop.permute.xlu0 %318
        %322 = vset.pattern.permute.xlu0 0
        %323 = vperm.xlu0 %322, %v256
        %v324 = vpop.permute.xlu0 %323
        %327 = vset.pattern.permute.xlu0 0
        %328 = vperm.xlu0 %327, %v257
        %v329 = vpop.permute.xlu0 %328
        %332 = vset.pattern.permute.xlu0 0
        %333 = vperm.xlu0 %332, %v258
        %v334 = vpop.permute.xlu0 %333
        %337 = vset.pattern.permute.xlu0 0
        %338 = vperm.xlu0 %337, %v259
        %v339 = vpop.permute.xlu0 %338
        %342 = vset.pattern.permute.xlu0 0
        %343 = vperm.xlu0 %342, %v260
        %v344 = vpop.permute.xlu0 %343
        %347 = vset.pattern.permute.xlu0 0
        %348 = vperm.xlu0 %347, %v261
        %v349 = vpop.permute.xlu0 %348
        %352 = vset.pattern.permute.xlu0 0
        %353 = vperm.xlu0 %352, %v262
        %v354 = vpop.permute.xlu0 %353
        %357 = vset.pattern.permute.xlu0 0
        %358 = vperm.xlu0 %357, %v263
        %v359 = vpop.permute.xlu0 %358
        %v362 = vlaneseq
        %v363 = vshrl.u32 %v362, 7
        %v364 = vsub.s32 0, %v363
        %v365 = vrot.slane %v264, %v364
        %v367 = vsub.f32 %v284, %v365
        %v368 = vsub.f32 %v289, %v365
        %v369 = vsub.f32 %v294, %v365
        %v370 = vsub.f32 %v299, %v365
        %v371 = vsub.f32 %v304, %v365
        %v372 = vsub.f32 %v309, %v365
        %v373 = vsub.f32 %v314, %v365
        %v374 = vsub.f32 %v319, %v365
        %v375 = vsub.f32 %v324, %v365
        %v376 = vsub.f32 %v329, %v365
        %v377 = vsub.f32 %v334, %v365
        %v378 = vsub.f32 %v339, %v365
        %v379 = vsub.f32 %v344, %v365
        %v380 = vsub.f32 %v349, %v365
        %v381 = vsub.f32 %v354, %v365
        %v382 = vsub.f32 %v359, %v365
        %v383 = vand.u32 2147483647, %v367
        %v384 = vand.u32 2147483647, %v368
        %v385 = vand.u32 2147483647, %v369
        %v386 = vand.u32 2147483647, %v370
        %v387 = vand.u32 2147483647, %v371
        %v388 = vand.u32 2147483647, %v372
        %v389 = vand.u32 2147483647, %v373
        %v390 = vand.u32 2147483647, %v374
        %v391 = vand.u32 2147483647, %v375
        %v392 = vand.u32 2147483647, %v376
        %v393 = vand.u32 2147483647, %v377
        %v394 = vand.u32 2147483647, %v378
        %v395 = vand.u32 2147483647, %v379
        %v396 = vand.u32 2147483647, %v380
        %v397 = vand.u32 2147483647, %v381
        %v398 = vand.u32 2147483647, %v382
        %vm399 = vcmp.lt.f32.partialorder %v383, 0.3
        %vm400 = vcmp.lt.f32.partialorder %v384, 0.3
        %vm401 = vcmp.lt.f32.partialorder %v385, 0.3
        %vm402 = vcmp.lt.f32.partialorder %v386, 0.3
        %vm403 = vcmp.lt.f32.partialorder %v387, 0.3
        %vm404 = vcmp.lt.f32.partialorder %v388, 0.3
        %vm405 = vcmp.lt.f32.partialorder %v389, 0.3
        %vm406 = vcmp.lt.f32.partialorder %v390, 0.3
        %vm407 = vcmp.lt.f32.partialorder %v391, 0.3
        %vm408 = vcmp.lt.f32.partialorder %v392, 0.3
        %vm409 = vcmp.lt.f32.partialorder %v393, 0.3
        %vm410 = vcmp.lt.f32.partialorder %v394, 0.3
        %vm411 = vcmp.lt.f32.partialorder %v395, 0.3
        %vm412 = vcmp.lt.f32.partialorder %v396, 0.3
        %vm413 = vcmp.lt.f32.partialorder %v397, 0.3
        %vm414 = vcmp.lt.f32.partialorder %v398, 0.3
        %v415 = vsel %vm399, 1, 0
        %v416 = vsel %vm400, 1, 0
        %v417 = vsel %vm401, 1, 0
        %v418 = vsel %vm402, 1, 0
        %v419 = vsel %vm403, 1, 0
        %v420 = vsel %vm404, 1, 0
        %v421 = vsel %vm405, 1, 0
        %v422 = vsel %vm406, 1, 0
        %v423 = vsel %vm407, 1, 0
        %v424 = vsel %vm408, 1, 0
        %v425 = vsel %vm409, 1, 0
        %v426 = vsel %vm410, 1, 0
        %v427 = vsel %vm411, 1, 0
        %v428 = vsel %vm412, 1, 0
        %v429 = vsel %vm413, 1, 0
        %v430 = vsel %vm414, 1, 0
        %v431 = vcvt.s32.f32 %v415
        %v432 = vcvt.s32.f32 %v416
        %v433 = vcvt.s32.f32 %v417
        %v434 = vcvt.s32.f32 %v418
        %v435 = vcvt.s32.f32 %v419
        %v436 = vcvt.s32.f32 %v420
        %v437 = vcvt.s32.f32 %v421
        %v438 = vcvt.s32.f32 %v422
        %v439 = vcvt.s32.f32 %v423
        %v440 = vcvt.s32.f32 %v424
        %v441 = vcvt.s32.f32 %v425
        %v442 = vcvt.s32.f32 %v426
        %v443 = vcvt.s32.f32 %v427
        %v444 = vcvt.s32.f32 %v428
        %v445 = vcvt.s32.f32 %v429
        %v446 = vcvt.s32.f32 %v430
        %v447 = vpack.c.bf16 %v432, %v431
        %v448 = vpack.c.bf16 %v434, %v433
        %v449 = vpack.c.bf16 %v436, %v435
        %v450 = vpack.c.bf16 %v438, %v437
        %v451 = vpack.c.bf16 %v440, %v439
        %v452 = vpack.c.bf16 %v442, %v441
        %v453 = vpack.c.bf16 %v444, %v443
        %v454 = vpack.c.bf16 %v446, %v445
        %v471 = vunpack.c.l.b16 %v265
        %v472 = vunpack.c.l.b16 %v266
        %v473 = vunpack.c.l.b16 %v267
        %v474 = vunpack.c.l.b16 %v268
        %v475 = vunpack.c.l.b16 %v269
        %v476 = vunpack.c.l.b16 %v270
        %v477 = vunpack.c.l.b16 %v271
        %v478 = vunpack.c.l.b16 %v272
        %v479 = vunpack.c.l.b16 %v273
        %v480 = vunpack.c.l.b16 %v274
        %v481 = vunpack.c.l.b16 %v275
        %v482 = vunpack.c.l.b16 %v276
        %v483 = vunpack.c.l.b16 %v277
        %v484 = vunpack.c.l.b16 %v278
        %v485 = vunpack.c.l.b16 %v279
        %v486 = vunpack.c.l.b16 %v280
        %v487 = vpack.c.b16 %v472, %v471
        %v488 = vpack.c.b16 %v474, %v473
        %v489 = vpack.c.b16 %v476, %v475
        %v490 = vpack.c.b16 %v478, %v477
        %v491 = vpack.c.b16 %v480, %v479
        %v492 = vpack.c.b16 %v482, %v481
        %v493 = vpack.c.b16 %v484, %v483
        %v494 = vpack.c.b16 %v486, %v485
        %503 = vmatprep.subr.bf16.mxu0 0
        %504 = vmatpush1.bf16.msra.mxu0 %v454
        %505 = vmatprep.subr.bf16.mxu0 0
        %506 = vmatpush1.bf16.msra.mxu0 %v453
        %507 = vmatprep.subr.bf16.mxu0 0
        %508 = vmatpush1.bf16.msra.mxu0 %v452
        %509 = vmatprep.subr.bf16.mxu0 0
        %510 = vmatpush1.bf16.msra.mxu0 %v451
        %511 = vmatprep.subr.bf16.mxu0 0
        %512 = vmatpush1.bf16.msra.mxu0 %v450
        %513 = vmatprep.subr.bf16.mxu0 0
        %514 = vmatpush1.bf16.msra.mxu0 %v449
        %515 = vmatprep.subr.bf16.mxu0 0
        %516 = vmatpush1.bf16.msra.mxu0 %v448
        %517 = vmatprep.subr.bf16.mxu0 0
        %518 = vmatpush1.bf16.msra.mxu0 %v447
        %519 = vmatprep.subr.bf16.mxu0 0
        %520 = vmatpush2.bf16.msra.mxu0 0
        %521 = vmatprep.subr.bf16.mxu0 0
        %522 = vmatpush2.bf16.msra.mxu0 0
        %523 = vmatprep.subr.bf16.mxu0 0
        %524 = vmatpush2.bf16.msra.mxu0 0
        %525 = vmatprep.subr.bf16.mxu0 0
        %526 = vmatpush2.bf16.msra.mxu0 0
        %527 = vmatprep.subr.bf16.mxu0 0
        %528 = vmatpush2.bf16.msra.mxu0 0
        %529 = vmatprep.subr.bf16.mxu0 0
        %530 = vmatpush2.bf16.msra.mxu0 0
        %531 = vmatprep.subr.bf16.mxu0 0
        %532 = vmatpush2.bf16.msra.mxu0 0
        %533 = vmatprep.subr.bf16.mxu0 0
        %534 = vmatpush2.bf16.msra.mxu0 0
        %535 = vmatprep.mubr.bf16.mxu0 0
        %536 = vmatmul.mubr.bf16.gmra.mxu0 %v487
        %v537 = vpop.f32.mrf.mxu0
        %v538 = vadd.f32 0.0, %v537
        %v539 = vpop.f32.mrf.mxu0
        %v540 = vpop.f32.mrf.mxu0
        %v541 = vadd.f32 0.0, %v540
        %v542 = vpop.f32.mrf.mxu0
        %543 = vmatprep.mubr.bf16.mxu0 0
        %544 = vmatmul.mubr.bf16.gmra.mxu0 %v488
        %v545 = vpop.f32.mrf.mxu0
        %v546 = vadd.f32 0.0, %v545
        %v547 = vpop.f32.mrf.mxu0
        %v548 = vpop.f32.mrf.mxu0
        %v549 = vadd.f32 0.0, %v548
        %v550 = vpop.f32.mrf.mxu0
        %551 = vmatprep.mubr.bf16.mxu0 0
        %552 = vmatmul.mubr.bf16.gmra.mxu0 %v489
        %v553 = vpop.f32.mrf.mxu0
        %v554 = vadd.f32 0.0, %v553
        %v555 = vpop.f32.mrf.mxu0
        %v556 = vpop.f32.mrf.mxu0
        %v557 = vadd.f32 0.0, %v556
        %v558 = vpop.f32.mrf.mxu0
        %559 = vmatprep.mubr.bf16.mxu0 0
        %560 = vmatmul.mubr.bf16.gmra.mxu0 %v490
        %v561 = vpop.f32.mrf.mxu0
        %v562 = vadd.f32 0.0, %v561
        %v563 = vpop.f32.mrf.mxu0
        %v564 = vpop.f32.mrf.mxu0
        %v565 = vadd.f32 0.0, %v564
        %v566 = vpop.f32.mrf.mxu0
        %567 = vmatprep.mubr.bf16.mxu0 0
        %568 = vmatmul.mubr.bf16.gmra.mxu0 %v491
        %v569 = vpop.f32.mrf.mxu0
        %v570 = vadd.f32 0.0, %v569
        %v571 = vpop.f32.mrf.mxu0
        %v572 = vpop.f32.mrf.mxu0
        %v573 = vadd.f32 0.0, %v572
        %v574 = vpop.f32.mrf.mxu0
        %575 = vmatprep.mubr.bf16.mxu0 0
        %576 = vmatmul.mubr.bf16.gmra.mxu0 %v492
        %v577 = vpop.f32.mrf.mxu0
        %v578 = vadd.f32 0.0, %v577
        %v579 = vpop.f32.mrf.mxu0
        %v580 = vpop.f32.mrf.mxu0
        %v581 = vadd.f32 0.0, %v580
        %v582 = vpop.f32.mrf.mxu0
        %583 = vmatprep.mubr.bf16.mxu0 0
        %584 = vmatmul.mubr.bf16.gmra.mxu0 %v493
        %v585 = vpop.f32.mrf.mxu0
        %v586 = vadd.f32 0.0, %v585
        %v587 = vpop.f32.mrf.mxu0
        %v588 = vpop.f32.mrf.mxu0
        %v589 = vadd.f32 0.0, %v588
        %v590 = vpop.f32.mrf.mxu0
        %591 = vmatprep.mubr.bf16.mxu0 0
        %592 = vmatmul.mubr.bf16.gmra.mxu0 %v494
        %v593 = vpop.f32.mrf.mxu0
        %v594 = vadd.f32 0.0, %v593
        %v595 = vpop.f32.mrf.mxu0
        %v596 = vpop.f32.mrf.mxu0
        %v597 = vadd.f32 0.0, %v596
        %v598 = vpop.f32.mrf.mxu0
        %599 = vdwg.mxu0
        %vm600 = vcmp.le.f32.partialorder %v538, 0.0
        %vm601 = vcmp.le.f32.partialorder %v541, 0.0
        %vm602 = vcmp.le.f32.partialorder %v546, 0.0
        %vm603 = vcmp.le.f32.partialorder %v549, 0.0
        %vm604 = vcmp.le.f32.partialorder %v554, 0.0
        %vm605 = vcmp.le.f32.partialorder %v557, 0.0
        %vm606 = vcmp.le.f32.partialorder %v562, 0.0
        %vm607 = vcmp.le.f32.partialorder %v565, 0.0
        %vm608 = vcmp.le.f32.partialorder %v570, 0.0
        %vm609 = vcmp.le.f32.partialorder %v573, 0.0
        %vm610 = vcmp.le.f32.partialorder %v578, 0.0
        %vm611 = vcmp.le.f32.partialorder %v581, 0.0
        %vm612 = vcmp.le.f32.partialorder %v586, 0.0
        %vm613 = vcmp.le.f32.partialorder %v589, 0.0
        %vm614 = vcmp.le.f32.partialorder %v594, 0.0
        %vm615 = vcmp.le.f32.partialorder %v597, 0.0
        %v616 = vsel %vm600, 1, 0
        %v617 = vsel %vm601, 1, 0
        %v618 = vsel %vm602, 1, 0
        %v619 = vsel %vm603, 1, 0
        %v620 = vsel %vm604, 1, 0
        %v621 = vsel %vm605, 1, 0
        %v622 = vsel %vm606, 1, 0
        %v623 = vsel %vm607, 1, 0
        %v624 = vsel %vm608, 1, 0
        %v625 = vsel %vm609, 1, 0
        %v626 = vsel %vm610, 1, 0
        %v627 = vsel %vm611, 1, 0
        %v628 = vsel %vm612, 1, 0
        %v629 = vsel %vm613, 1, 0
        %v630 = vsel %vm614, 1, 0
        %v631 = vsel %vm615, 1, 0
        %v632 = vcvt.s32.f32 %v616
        %v633 = vcvt.s32.f32 %v617
        %v634 = vcvt.s32.f32 %v618
        %v635 = vcvt.s32.f32 %v619
        %v636 = vcvt.s32.f32 %v620
        %v637 = vcvt.s32.f32 %v621
        %v638 = vcvt.s32.f32 %v622
        %v639 = vcvt.s32.f32 %v623
        %v640 = vcvt.s32.f32 %v624
        %v641 = vcvt.s32.f32 %v625
        %v642 = vcvt.s32.f32 %v626
        %v643 = vcvt.s32.f32 %v627
        %v644 = vcvt.s32.f32 %v628
        %v645 = vcvt.s32.f32 %v629
        %v646 = vcvt.s32.f32 %v630
        %v647 = vcvt.s32.f32 %v631
        %v648 = vadd.f32 %v632, %v633
        %v649 = vadd.f32 %v648, %v634
        %v650 = vadd.f32 %v649, %v635
        %v651 = vadd.f32 %v650, %v636
        %v652 = vadd.f32 %v651, %v637
        %v653 = vadd.f32 %v652, %v638
        %v654 = vadd.f32 %v653, %v639
        %v655 = vadd.f32 %v654, %v640
        %v656 = vadd.f32 %v655, %v641
        %v657 = vadd.f32 %v656, %v642
        %v658 = vadd.f32 %v657, %v643
        %v659 = vadd.f32 %v658, %v644
        %v660 = vadd.f32 %v659, %v645
        %v661 = vadd.f32 %v660, %v646
        %v662 = vadd.f32 %v661, %v647
        %v663 = vrot.slane %v662, 4
        %v664 = vadd.f32 %v662, %v663
        %v665 = vrot.slane %v664, 2
        %v666 = vadd.f32 %v664, %v665
        %v667 = vrot.slane %v666, 1
        %v668 = vadd.f32 %v666, %v667
        %v669 = vadd.f32 %v668, 0.0
        %vm670 = vcmp.le.f32.partialorder %v538, 1.0
        %vm671 = vcmp.le.f32.partialorder %v541, 1.0
        %vm672 = vcmp.le.f32.partialorder %v546, 1.0
        %vm673 = vcmp.le.f32.partialorder %v549, 1.0
        %vm674 = vcmp.le.f32.partialorder %v554, 1.0
        %vm675 = vcmp.le.f32.partialorder %v557, 1.0
        %vm676 = vcmp.le.f32.partialorder %v562, 1.0
        %vm677 = vcmp.le.f32.partialorder %v565, 1.0
        %vm678 = vcmp.le.f32.partialorder %v570, 1.0
        %vm679 = vcmp.le.f32.partialorder %v573, 1.0
        %vm680 = vcmp.le.f32.partialorder %v578, 1.0
        %vm681 = vcmp.le.f32.partialorder %v581, 1.0
        %vm682 = vcmp.le.f32.partialorder %v586, 1.0
        %vm683 = vcmp.le.f32.partialorder %v589, 1.0
        %vm684 = vcmp.le.f32.partialorder %v594, 1.0
        %vm685 = vcmp.le.f32.partialorder %v597, 1.0
        %v686 = vsel %vm670, 1, 0
        %v687 = vsel %vm671, 1, 0
        %v688 = vsel %vm672, 1, 0
        %v689 = vsel %vm673, 1, 0
        %v690 = vsel %vm674, 1, 0
        %v691 = vsel %vm675, 1, 0
        %v692 = vsel %vm676, 1, 0
        %v693 = vsel %vm677, 1, 0
        %v694 = vsel %vm678, 1, 0
        %v695 = vsel %vm679, 1, 0
        %v696 = vsel %vm680, 1, 0
        %v697 = vsel %vm681, 1, 0
        %v698 = vsel %vm682, 1, 0
        %v699 = vsel %vm683, 1, 0
        %v700 = vsel %vm684, 1, 0
        %v701 = vsel %vm685, 1, 0
        %v702 = vcvt.s32.f32 %v686
        %v703 = vcvt.s32.f32 %v687
        %v704 = vcvt.s32.f32 %v688
        %v705 = vcvt.s32.f32 %v689
        %v706 = vcvt.s32.f32 %v690
        %v707 = vcvt.s32.f32 %v691
        %v708 = vcvt.s32.f32 %v692
        %v709 = vcvt.s32.f32 %v693
        %v710 = vcvt.s32.f32 %v694
        %v711 = vcvt.s32.f32 %v695
        %v712 = vcvt.s32.f32 %v696
        %v713 = vcvt.s32.f32 %v697
        %v714 = vcvt.s32.f32 %v698
        %v715 = vcvt.s32.f32 %v699
        %v716 = vcvt.s32.f32 %v700
        %v717 = vcvt.s32.f32 %v701
        %v718 = vadd.f32 %v702, %v703
        %v719 = vadd.f32 %v718, %v704
        %v720 = vadd.f32 %v719, %v705
        %v721 = vadd.f32 %v720, %v706
        %v722 = vadd.f32 %v721, %v707
        %v723 = vadd.f32 %v722, %v708
        %v724 = vadd.f32 %v723, %v709
        %v725 = vadd.f32 %v724, %v710
        %v726 = vadd.f32 %v725, %v711
        %v727 = vadd.f32 %v726, %v712
        %v728 = vadd.f32 %v727, %v713
        %v729 = vadd.f32 %v728, %v714
        %v730 = vadd.f32 %v729, %v715
        %v731 = vadd.f32 %v730, %v716
        %v732 = vadd.f32 %v731, %v717
        %v733 = vrot.slane %v732, 4
        %v734 = vadd.f32 %v732, %v733
        %v735 = vrot.slane %v734, 2
        %v736 = vadd.f32 %v734, %v735
        %v737 = vrot.slane %v736, 1
        %v738 = vadd.f32 %v736, %v737
        %v739 = vadd.f32 %v738, 0.0
        %vm740 = vcmp.le.f32.partialorder %v538, 2.0
        %vm741 = vcmp.le.f32.partialorder %v541, 2.0
        %vm742 = vcmp.le.f32.partialorder %v546, 2.0
        %vm743 = vcmp.le.f32.partialorder %v549, 2.0
        %vm744 = vcmp.le.f32.partialorder %v554, 2.0
        %vm745 = vcmp.le.f32.partialorder %v557, 2.0
        %vm746 = vcmp.le.f32.partialorder %v562, 2.0
        %vm747 = vcmp.le.f32.partialorder %v565, 2.0
        %vm748 = vcmp.le.f32.partialorder %v570, 2.0
        %vm749 = vcmp.le.f32.partialorder %v573, 2.0
        %vm750 = vcmp.le.f32.partialorder %v578, 2.0
        %vm751 = vcmp.le.f32.partialorder %v581, 2.0
        %vm752 = vcmp.le.f32.partialorder %v586, 2.0
        %vm753 = vcmp.le.f32.partialorder %v589, 2.0
        %vm754 = vcmp.le.f32.partialorder %v594, 2.0
        %vm755 = vcmp.le.f32.partialorder %v597, 2.0
        %v756 = vsel %vm740, 1, 0
        %v757 = vsel %vm741, 1, 0
        %v758 = vsel %vm742, 1, 0
        %v759 = vsel %vm743, 1, 0
        %v760 = vsel %vm744, 1, 0
        %v761 = vsel %vm745, 1, 0
        %v762 = vsel %vm746, 1, 0
        %v763 = vsel %vm747, 1, 0
        %v764 = vsel %vm748, 1, 0
        %v765 = vsel %vm749, 1, 0
        %v766 = vsel %vm750, 1, 0
        %v767 = vsel %vm751, 1, 0
        %v768 = vsel %vm752, 1, 0
        %v769 = vsel %vm753, 1, 0
        %v770 = vsel %vm754, 1, 0
        %v771 = vsel %vm755, 1, 0
        %v772 = vcvt.s32.f32 %v756
        %v773 = vcvt.s32.f32 %v757
        %v774 = vcvt.s32.f32 %v758
        %v775 = vcvt.s32.f32 %v759
        %v776 = vcvt.s32.f32 %v760
        %v777 = vcvt.s32.f32 %v761
        %v778 = vcvt.s32.f32 %v762
        %v779 = vcvt.s32.f32 %v763
        %v780 = vcvt.s32.f32 %v764
        %v781 = vcvt.s32.f32 %v765
        %v782 = vcvt.s32.f32 %v766
        %v783 = vcvt.s32.f32 %v767
        %v784 = vcvt.s32.f32 %v768
        %v785 = vcvt.s32.f32 %v769
        %v786 = vcvt.s32.f32 %v770
        %v787 = vcvt.s32.f32 %v771
        %v788 = vadd.f32 %v772, %v773
        %v789 = vadd.f32 %v788, %v774
        %v790 = vadd.f32 %v789, %v775
        %v791 = vadd.f32 %v790, %v776
        %v792 = vadd.f32 %v791, %v777
        %v793 = vadd.f32 %v792, %v778
        %v794 = vadd.f32 %v793, %v779
        %v795 = vadd.f32 %v794, %v780
        %v796 = vadd.f32 %v795, %v781
        %v797 = vadd.f32 %v796, %v782
        %v798 = vadd.f32 %v797, %v783
        %v799 = vadd.f32 %v798, %v784
        %v800 = vadd.f32 %v799, %v785
        %v801 = vadd.f32 %v800, %v786
        %v802 = vadd.f32 %v801, %v787
        %v803 = vrot.slane %v802, 4
        %v804 = vadd.f32 %v802, %v803
        %v805 = vrot.slane %v804, 2
        %v806 = vadd.f32 %v804, %v805
        %v807 = vrot.slane %v806, 1
        %v808 = vadd.f32 %v806, %v807
        %v809 = vadd.f32 %v808, 0.0
        %vm810 = vcmp.le.f32.partialorder %v538, 3.0
        %vm811 = vcmp.le.f32.partialorder %v541, 3.0
        %vm812 = vcmp.le.f32.partialorder %v546, 3.0
        %vm813 = vcmp.le.f32.partialorder %v549, 3.0
        %vm814 = vcmp.le.f32.partialorder %v554, 3.0
        %vm815 = vcmp.le.f32.partialorder %v557, 3.0
        %vm816 = vcmp.le.f32.partialorder %v562, 3.0
        %vm817 = vcmp.le.f32.partialorder %v565, 3.0
        %vm818 = vcmp.le.f32.partialorder %v570, 3.0
        %vm819 = vcmp.le.f32.partialorder %v573, 3.0
        %vm820 = vcmp.le.f32.partialorder %v578, 3.0
        %vm821 = vcmp.le.f32.partialorder %v581, 3.0
        %vm822 = vcmp.le.f32.partialorder %v586, 3.0
        %vm823 = vcmp.le.f32.partialorder %v589, 3.0
        %vm824 = vcmp.le.f32.partialorder %v594, 3.0
        %vm825 = vcmp.le.f32.partialorder %v597, 3.0
        %v826 = vsel %vm810, 1, 0
        %v827 = vsel %vm811, 1, 0
        %v828 = vsel %vm812, 1, 0
        %v829 = vsel %vm813, 1, 0
        %v830 = vsel %vm814, 1, 0
        %v831 = vsel %vm815, 1, 0
        %v832 = vsel %vm816, 1, 0
        %v833 = vsel %vm817, 1, 0
        %v834 = vsel %vm818, 1, 0
        %v835 = vsel %vm819, 1, 0
        %v836 = vsel %vm820, 1, 0
        %v837 = vsel %vm821, 1, 0
        %v838 = vsel %vm822, 1, 0
        %v839 = vsel %vm823, 1, 0
        %v840 = vsel %vm824, 1, 0
        %v841 = vsel %vm825, 1, 0
        %v842 = vcvt.s32.f32 %v826
        %v843 = vcvt.s32.f32 %v827
        %v844 = vcvt.s32.f32 %v828
        %v845 = vcvt.s32.f32 %v829
        %v846 = vcvt.s32.f32 %v830
        %v847 = vcvt.s32.f32 %v831
        %v848 = vcvt.s32.f32 %v832
        %v849 = vcvt.s32.f32 %v833
        %v850 = vcvt.s32.f32 %v834
        %v851 = vcvt.s32.f32 %v835
        %v852 = vcvt.s32.f32 %v836
        %v853 = vcvt.s32.f32 %v837
        %v854 = vcvt.s32.f32 %v838
        %v855 = vcvt.s32.f32 %v839
        %v856 = vcvt.s32.f32 %v840
        %v857 = vcvt.s32.f32 %v841
        %v858 = vadd.f32 %v842, %v843
        %v859 = vadd.f32 %v858, %v844
        %v860 = vadd.f32 %v859, %v845
        %v861 = vadd.f32 %v860, %v846
        %v862 = vadd.f32 %v861, %v847
        %v863 = vadd.f32 %v862, %v848
        %v864 = vadd.f32 %v863, %v849
        %v865 = vadd.f32 %v864, %v850
        %v866 = vadd.f32 %v865, %v851
        %v867 = vadd.f32 %v866, %v852
        %v868 = vadd.f32 %v867, %v853
        %v869 = vadd.f32 %v868, %v854
        %v870 = vadd.f32 %v869, %v855
        %v871 = vadd.f32 %v870, %v856
        %v872 = vadd.f32 %v871, %v857
        %v873 = vrot.slane %v872, 4
        %v874 = vadd.f32 %v872, %v873
        %v875 = vrot.slane %v874, 2
        %v876 = vadd.f32 %v874, %v875
        %v877 = vrot.slane %v876, 1
        %v878 = vadd.f32 %v876, %v877
        %v879 = vadd.f32 %v878, 0.0
        %vm880 = vcmp.le.f32.partialorder %v538, 4.0
        %vm881 = vcmp.le.f32.partialorder %v541, 4.0
        %vm882 = vcmp.le.f32.partialorder %v546, 4.0
        %vm883 = vcmp.le.f32.partialorder %v549, 4.0
        %vm884 = vcmp.le.f32.partialorder %v554, 4.0
        %vm885 = vcmp.le.f32.partialorder %v557, 4.0
        %vm886 = vcmp.le.f32.partialorder %v562, 4.0
        %vm887 = vcmp.le.f32.partialorder %v565, 4.0
        %vm888 = vcmp.le.f32.partialorder %v570, 4.0
        %vm889 = vcmp.le.f32.partialorder %v573, 4.0
        %vm890 = vcmp.le.f32.partialorder %v578, 4.0
        %vm891 = vcmp.le.f32.partialorder %v581, 4.0
        %vm892 = vcmp.le.f32.partialorder %v586, 4.0
        %vm893 = vcmp.le.f32.partialorder %v589, 4.0
        %vm894 = vcmp.le.f32.partialorder %v594, 4.0
        %vm895 = vcmp.le.f32.partialorder %v597, 4.0
        %v896 = vsel %vm880, 1, 0
        %v897 = vsel %vm881, 1, 0
        %v898 = vsel %vm882, 1, 0
        %v899 = vsel %vm883, 1, 0
        %v900 = vsel %vm884, 1, 0
        %v901 = vsel %vm885, 1, 0
        %v902 = vsel %vm886, 1, 0
        %v903 = vsel %vm887, 1, 0
        %v904 = vsel %vm888, 1, 0
        %v905 = vsel %vm889, 1, 0
        %v906 = vsel %vm890, 1, 0
        %v907 = vsel %vm891, 1, 0
        %v908 = vsel %vm892, 1, 0
        %v909 = vsel %vm893, 1, 0
        %v910 = vsel %vm894, 1, 0
        %v911 = vsel %vm895, 1, 0
        %v912 = vcvt.s32.f32 %v896
        %v913 = vcvt.s32.f32 %v897
        %v914 = vcvt.s32.f32 %v898
        %v915 = vcvt.s32.f32 %v899
        %v916 = vcvt.s32.f32 %v900
        %v917 = vcvt.s32.f32 %v901
        %v918 = vcvt.s32.f32 %v902
        %v919 = vcvt.s32.f32 %v903
        %v920 = vcvt.s32.f32 %v904
        %v921 = vcvt.s32.f32 %v905
        %v922 = vcvt.s32.f32 %v906
        %v923 = vcvt.s32.f32 %v907
        %v924 = vcvt.s32.f32 %v908
        %v925 = vcvt.s32.f32 %v909
        %v926 = vcvt.s32.f32 %v910
        %v927 = vcvt.s32.f32 %v911
        %v928 = vadd.f32 %v912, %v913
        %v929 = vadd.f32 %v928, %v914
        %v930 = vadd.f32 %v929, %v915
        %v931 = vadd.f32 %v930, %v916
        %v932 = vadd.f32 %v931, %v917
        %v933 = vadd.f32 %v932, %v918
        %v934 = vadd.f32 %v933, %v919
        %v935 = vadd.f32 %v934, %v920
        %v936 = vadd.f32 %v935, %v921
        %v937 = vadd.f32 %v936, %v922
        %v938 = vadd.f32 %v937, %v923
        %v939 = vadd.f32 %v938, %v924
        %v940 = vadd.f32 %v939, %v925
        %v941 = vadd.f32 %v940, %v926
        %v942 = vadd.f32 %v941, %v927
        %v943 = vrot.slane %v942, 4
        %v944 = vadd.f32 %v942, %v943
        %v945 = vrot.slane %v944, 2
        %v946 = vadd.f32 %v944, %v945
        %v947 = vrot.slane %v946, 1
        %v948 = vadd.f32 %v946, %v947
        %v949 = vadd.f32 %v948, 0.0
        %vm950 = vcmp.le.f32.partialorder %v538, 5.0
        %vm951 = vcmp.le.f32.partialorder %v541, 5.0
        %vm952 = vcmp.le.f32.partialorder %v546, 5.0
        %vm953 = vcmp.le.f32.partialorder %v549, 5.0
        %vm954 = vcmp.le.f32.partialorder %v554, 5.0
        %vm955 = vcmp.le.f32.partialorder %v557, 5.0
        %vm956 = vcmp.le.f32.partialorder %v562, 5.0
        %vm957 = vcmp.le.f32.partialorder %v565, 5.0
        %vm958 = vcmp.le.f32.partialorder %v570, 5.0
        %vm959 = vcmp.le.f32.partialorder %v573, 5.0
        %vm960 = vcmp.le.f32.partialorder %v578, 5.0
        %vm961 = vcmp.le.f32.partialorder %v581, 5.0
        %vm962 = vcmp.le.f32.partialorder %v586, 5.0
        %vm963 = vcmp.le.f32.partialorder %v589, 5.0
        %vm964 = vcmp.le.f32.partialorder %v594, 5.0
        %vm965 = vcmp.le.f32.partialorder %v597, 5.0
        %v966 = vsel %vm950, 1, 0
        %v967 = vsel %vm951, 1, 0
        %v968 = vsel %vm952, 1, 0
        %v969 = vsel %vm953, 1, 0
        %v970 = vsel %vm954, 1, 0
        %v971 = vsel %vm955, 1, 0
        %v972 = vsel %vm956, 1, 0
        %v973 = vsel %vm957, 1, 0
        %v974 = vsel %vm958, 1, 0
        %v975 = vsel %vm959, 1, 0
        %v976 = vsel %vm960, 1, 0
        %v977 = vsel %vm961, 1, 0
        %v978 = vsel %vm962, 1, 0
        %v979 = vsel %vm963, 1, 0
        %v980 = vsel %vm964, 1, 0
        %v981 = vsel %vm965, 1, 0
        %v982 = vcvt.s32.f32 %v966
        %v983 = vcvt.s32.f32 %v967
        %v984 = vcvt.s32.f32 %v968
        %v985 = vcvt.s32.f32 %v969
        %v986 = vcvt.s32.f32 %v970
        %v987 = vcvt.s32.f32 %v971
        %v988 = vcvt.s32.f32 %v972
        %v989 = vcvt.s32.f32 %v973
        %v990 = vcvt.s32.f32 %v974
        %v991 = vcvt.s32.f32 %v975
        %v992 = vcvt.s32.f32 %v976
        %v993 = vcvt.s32.f32 %v977
        %v994 = vcvt.s32.f32 %v978
        %v995 = vcvt.s32.f32 %v979
        %v996 = vcvt.s32.f32 %v980
        %v997 = vcvt.s32.f32 %v981
        %v998 = vadd.f32 %v982, %v983
        %v999 = vadd.f32 %v998, %v984
        %v1000 = vadd.f32 %v999, %v985
        %v1001 = vadd.f32 %v1000, %v986
        %v1002 = vadd.f32 %v1001, %v987
        %v1003 = vadd.f32 %v1002, %v988
        %v1004 = vadd.f32 %v1003, %v989
        %v1005 = vadd.f32 %v1004, %v990
        %v1006 = vadd.f32 %v1005, %v991
        %v1007 = vadd.f32 %v1006, %v992
        %v1008 = vadd.f32 %v1007, %v993
        %v1009 = vadd.f32 %v1008, %v994
        %v1010 = vadd.f32 %v1009, %v995
        %v1011 = vadd.f32 %v1010, %v996
        %v1012 = vadd.f32 %v1011, %v997
        %v1013 = vrot.slane %v1012, 4
        %v1014 = vadd.f32 %v1012, %v1013
        %v1015 = vrot.slane %v1014, 2
        %v1016 = vadd.f32 %v1014, %v1015
        %v1017 = vrot.slane %v1016, 1
        %v1018 = vadd.f32 %v1016, %v1017
        %v1019 = vadd.f32 %v1018, 0.0
        %vm1020 = vcmp.le.f32.partialorder %v538, 6.0
        %vm1021 = vcmp.le.f32.partialorder %v541, 6.0
        %vm1022 = vcmp.le.f32.partialorder %v546, 6.0
        %vm1023 = vcmp.le.f32.partialorder %v549, 6.0
        %vm1024 = vcmp.le.f32.partialorder %v554, 6.0
        %vm1025 = vcmp.le.f32.partialorder %v557, 6.0
        %vm1026 = vcmp.le.f32.partialorder %v562, 6.0
        %vm1027 = vcmp.le.f32.partialorder %v565, 6.0
        %vm1028 = vcmp.le.f32.partialorder %v570, 6.0
        %vm1029 = vcmp.le.f32.partialorder %v573, 6.0
        %vm1030 = vcmp.le.f32.partialorder %v578, 6.0
        %vm1031 = vcmp.le.f32.partialorder %v581, 6.0
        %vm1032 = vcmp.le.f32.partialorder %v586, 6.0
        %vm1033 = vcmp.le.f32.partialorder %v589, 6.0
        %vm1034 = vcmp.le.f32.partialorder %v594, 6.0
        %vm1035 = vcmp.le.f32.partialorder %v597, 6.0
        %v1036 = vsel %vm1020, 1, 0
        %v1037 = vsel %vm1021, 1, 0
        %v1038 = vsel %vm1022, 1, 0
        %v1039 = vsel %vm1023, 1, 0
        %v1040 = vsel %vm1024, 1, 0
        %v1041 = vsel %vm1025, 1, 0
        %v1042 = vsel %vm1026, 1, 0
        %v1043 = vsel %vm1027, 1, 0
        %v1044 = vsel %vm1028, 1, 0
        %v1045 = vsel %vm1029, 1, 0
        %v1046 = vsel %vm1030, 1, 0
        %v1047 = vsel %vm1031, 1, 0
        %v1048 = vsel %vm1032, 1, 0
        %v1049 = vsel %vm1033, 1, 0
        %v1050 = vsel %vm1034, 1, 0
        %v1051 = vsel %vm1035, 1, 0
        %v1052 = vcvt.s32.f32 %v1036
        %v1053 = vcvt.s32.f32 %v1037
        %v1054 = vcvt.s32.f32 %v1038
        %v1055 = vcvt.s32.f32 %v1039
        %v1056 = vcvt.s32.f32 %v1040
        %v1057 = vcvt.s32.f32 %v1041
        %v1058 = vcvt.s32.f32 %v1042
        %v1059 = vcvt.s32.f32 %v1043
        %v1060 = vcvt.s32.f32 %v1044
        %v1061 = vcvt.s32.f32 %v1045
        %v1062 = vcvt.s32.f32 %v1046
        %v1063 = vcvt.s32.f32 %v1047
        %v1064 = vcvt.s32.f32 %v1048
        %v1065 = vcvt.s32.f32 %v1049
        %v1066 = vcvt.s32.f32 %v1050
        %v1067 = vcvt.s32.f32 %v1051
        %v1068 = vadd.f32 %v1052, %v1053
        %v1069 = vadd.f32 %v1068, %v1054
        %v1070 = vadd.f32 %v1069, %v1055
        %v1071 = vadd.f32 %v1070, %v1056
        %v1072 = vadd.f32 %v1071, %v1057
        %v1073 = vadd.f32 %v1072, %v1058
        %v1074 = vadd.f32 %v1073, %v1059
        %v1075 = vadd.f32 %v1074, %v1060
        %v1076 = vadd.f32 %v1075, %v1061
        %v1077 = vadd.f32 %v1076, %v1062
        %v1078 = vadd.f32 %v1077, %v1063
        %v1079 = vadd.f32 %v1078, %v1064
        %v1080 = vadd.f32 %v1079, %v1065
        %v1081 = vadd.f32 %v1080, %v1066
        %v1082 = vadd.f32 %v1081, %v1067
        %v1083 = vrot.slane %v1082, 4
        %v1084 = vadd.f32 %v1082, %v1083
        %v1085 = vrot.slane %v1084, 2
        %v1086 = vadd.f32 %v1084, %v1085
        %v1087 = vrot.slane %v1086, 1
        %v1088 = vadd.f32 %v1086, %v1087
        %v1089 = vadd.f32 %v1088, 0.0
        %vm1090 = vcmp.le.f32.partialorder %v538, 7.0
        %vm1091 = vcmp.le.f32.partialorder %v541, 7.0
        %vm1092 = vcmp.le.f32.partialorder %v546, 7.0
        %vm1093 = vcmp.le.f32.partialorder %v549, 7.0
        %vm1094 = vcmp.le.f32.partialorder %v554, 7.0
        %vm1095 = vcmp.le.f32.partialorder %v557, 7.0
        %vm1096 = vcmp.le.f32.partialorder %v562, 7.0
        %vm1097 = vcmp.le.f32.partialorder %v565, 7.0
        %vm1098 = vcmp.le.f32.partialorder %v570, 7.0
        %vm1099 = vcmp.le.f32.partialorder %v573, 7.0
        %vm1100 = vcmp.le.f32.partialorder %v578, 7.0
        %vm1101 = vcmp.le.f32.partialorder %v581, 7.0
        %vm1102 = vcmp.le.f32.partialorder %v586, 7.0
        %vm1103 = vcmp.le.f32.partialorder %v589, 7.0
        %vm1104 = vcmp.le.f32.partialorder %v594, 7.0
        %vm1105 = vcmp.le.f32.partialorder %v597, 7.0
        %v1106 = vsel %vm1090, 1, 0
        %v1107 = vsel %vm1091, 1, 0
        %v1108 = vsel %vm1092, 1, 0
        %v1109 = vsel %vm1093, 1, 0
        %v1110 = vsel %vm1094, 1, 0
        %v1111 = vsel %vm1095, 1, 0
        %v1112 = vsel %vm1096, 1, 0
        %v1113 = vsel %vm1097, 1, 0
        %v1114 = vsel %vm1098, 1, 0
        %v1115 = vsel %vm1099, 1, 0
        %v1116 = vsel %vm1100, 1, 0
        %v1117 = vsel %vm1101, 1, 0
        %v1118 = vsel %vm1102, 1, 0
        %v1119 = vsel %vm1103, 1, 0
        %v1120 = vsel %vm1104, 1, 0
        %v1121 = vsel %vm1105, 1, 0
        %v1122 = vcvt.s32.f32 %v1106
        %v1123 = vcvt.s32.f32 %v1107
        %v1124 = vcvt.s32.f32 %v1108
        %v1125 = vcvt.s32.f32 %v1109
        %v1126 = vcvt.s32.f32 %v1110
        %v1127 = vcvt.s32.f32 %v1111
        %v1128 = vcvt.s32.f32 %v1112
        %v1129 = vcvt.s32.f32 %v1113
        %v1130 = vcvt.s32.f32 %v1114
        %v1131 = vcvt.s32.f32 %v1115
        %v1132 = vcvt.s32.f32 %v1116
        %v1133 = vcvt.s32.f32 %v1117
        %v1134 = vcvt.s32.f32 %v1118
        %v1135 = vcvt.s32.f32 %v1119
        %v1136 = vcvt.s32.f32 %v1120
        %v1137 = vcvt.s32.f32 %v1121
        %v1138 = vadd.f32 %v1122, %v1123
        %v1139 = vadd.f32 %v1138, %v1124
        %v1140 = vadd.f32 %v1139, %v1125
        %v1141 = vadd.f32 %v1140, %v1126
        %v1142 = vadd.f32 %v1141, %v1127
        %v1143 = vadd.f32 %v1142, %v1128
        %v1144 = vadd.f32 %v1143, %v1129
        %v1145 = vadd.f32 %v1144, %v1130
        %v1146 = vadd.f32 %v1145, %v1131
        %v1147 = vadd.f32 %v1146, %v1132
        %v1148 = vadd.f32 %v1147, %v1133
        %v1149 = vadd.f32 %v1148, %v1134
        %v1150 = vadd.f32 %v1149, %v1135
        %v1151 = vadd.f32 %v1150, %v1136
        %v1152 = vadd.f32 %v1151, %v1137
        %v1153 = vrot.slane %v1152, 4
        %v1154 = vadd.f32 %v1152, %v1153
        %v1155 = vrot.slane %v1154, 2
        %v1156 = vadd.f32 %v1154, %v1155
        %v1157 = vrot.slane %v1156, 1
        %v1158 = vadd.f32 %v1156, %v1157
        %v1159 = vadd.f32 %v1158, 0.0
        %v1160 = vmin.f32 %v597, 8.0
        %v1161 = vcvt.f32.s32.to.zero.pseudo %v1160
        %vm1162 = vcmask 1040384
        %v1163 = vsel %vm1162, %v669, %v739
        %vm1164 = vcmask 1041408
        %v1165 = vsel %vm1164, %v1163, %v809
        %vm1166 = vcmask 1042432
        %v1167 = vsel %vm1166, %v1165, %v879
        %vm1168 = vcmask 1043456
        %v1169 = vsel %vm1168, %v1167, %v949
        %vm1170 = vcmask 1044480
        %v1171 = vsel %vm1170, %v1169, %v1019
        %vm1172 = vcmask 1045504
        %v1173 = vsel %vm1172, %v1171, %v1089
        %vm1174 = vcmask 1046528
        %v1175 = vsel %vm1174, %v1173, %v1159
        %v1176 = vcvt.f32.s32.to.zero.pseudo %v1175
        %vm1177 = vcmp.gt.s32.totalorder %v1161, 0
        %v1178 = vrot.slane %v1176, 1
        %v1179 = vsel %vm1177, %v1178, 0
        %v1180 = vlaneseq
        %v1181 = vshrl.u32 %v1180, 7
        %v1182 = vlaneseq
        %v1183 = vshrl.u32 %v1182, 7
        %v1184 = vsub.s32 7, %v1183
        %v1185 = vrot.slane %v1161, %v1184
        %vm1186 = vcmp.lt.s32.totalorder %v1181, %v1185
        %v1187 = vlaneseq
        %v1188 = vshrl.u32 %v1187, 7
        %v1189 = vsub.s32 7, %v1188
        %v1190 = vrot.slane %v1179, %v1189
        %v1191 = vsel %vm1186, %v1176, %v1190
        %1192 = vst [vmem:[%s229] sm:$0xff] %v1191
        %1193 = vst [vmem:[%s235 - $0x7] sm:$0x80] %v1161
        %s1194 = sand.u32 %s119, 1
        %s1195 = scalar_lea.sflag [#allocation3], %s1194
        %s1196 = sand.u32 %s119, 1
        %s1197 = smul.addr %s1196, 8
        %s1198 = scalar_lea.vmem [#allocation2], %s1197
        %s1199 = sand.u32 %s147, 1
        %s1200 = scalar_lea.sflag [#allocation5], %s1199
        %s1201 = sand.u32 %s147, 1
        %s1202 = scalar_lea.vmem [#allocation4], %s1201
        // Predicated region
        $region33: #{tpu_custom_call.1} parent=31 // pred_check
          %p1203 = pneg %p129
        $region34: #{tpu_custom_call.1} parent=31 // pred_check_branch
          %1205 = sbr.rel (%p1203) target = $region36
        $region35: #{tpu_custom_call.1} parent=31 // pred_region
          %s1207 = ssub.s32 128, 128
          %1208 = vsyncadd %s1195, %s1207
          %s1209 = sadd.s32 %s27, %s26
          %s1210 = smul.addr %s1209, 128
          %s1211 = scalar_lea.hbm %s3, %s1210
          %s1213 = sshll.u32 %s1198, 4
          %s1214 = int_to_ptr.vmem [resolvable:$true] %s1213
          %1216 = dma.vmem_to_hbm [thread:$0]  %s1214, 128, %s1211, %s1195
        $region36: #{tpu_custom_call.1} parent=31 // pred_fallthru
          _
        // Predicated region
        $region37: #{tpu_custom_call.1} parent=31 // pred_check
          %p1217 = pneg %p157
        $region38: #{tpu_custom_call.1} parent=31 // pred_check_branch
          %1219 = sbr.rel (%p1217) target = $region40
        $region39: #{tpu_custom_call.1} parent=31 // pred_region
          %s1221 = ssub.s32 16, 16
          %1222 = vsyncadd %s1200, %s1221
          %s1223 = sadd.s32 %s27, %s26
          %s1224 = smul.addr %s1223, 16
          %s1225 = scalar_lea.hbm %s4, %s1224
          %s1227 = sshll.u32 %s1202, 4
          %s1228 = int_to_ptr.vmem [resolvable:$true] %s1227
          %1230 = dma.vmem_to_hbm [thread:$0]  %s1228, 16, %s1225, %s1200
        $region40: #{tpu_custom_call.1} parent=31 // pred_fallthru
          _
      $region32: #{tpu_custom_call.1} parent=5 // pred_fallthru
        _
      %p1231 = scmp.le.s32.totalorder 2, %s17
      // Predicated region
      $region41: #{tpu_custom_call.1} parent=5 // pred_check
        %p1232 = pneg %p1231
      $region42: #{tpu_custom_call.1} parent=5 // pred_check_branch
        %1234 = sbr.rel (%p1232) target = $region44
      $region43: #{tpu_custom_call.1} parent=5 // pred_region
        %s1235 = ssub.s32 %s17, 2
        // Predicated region
        $region45: #{tpu_custom_call.1} parent=43 // pred_check
          %p1236 = pneg %p135
        $region46: #{tpu_custom_call.1} parent=43 // pred_check_branch
          %1238 = sbr.rel (%p1236) target = $region48
        $region47: #{tpu_custom_call.1} parent=43 // pred_region
          %s1239 = sand.u32 %s120, 1
          %s1240 = scalar_lea.sflag [#allocation3], %s1239
          %s1241 = sand.u32 %s120, 1
          %s1242 = smul.addr %s1241, 8
          %s1243 = scalar_lea.vmem [#allocation2], %s1242
          %1244 = dma.done %s1240, 128
        $region48: #{tpu_custom_call.1} parent=43 // pred_fallthru
          _
        // Predicated region
        $region49: #{tpu_custom_call.1} parent=43 // pred_check
          %p1245 = pneg %p163
        $region50: #{tpu_custom_call.1} parent=43 // pred_check_branch
          %1247 = sbr.rel (%p1245) target = $region52
        $region51: #{tpu_custom_call.1} parent=43 // pred_region
          %s1248 = sand.u32 %s148, 1
          %s1249 = scalar_lea.sflag [#allocation5], %s1248
          %s1250 = sand.u32 %s148, 1
          %s1251 = scalar_lea.vmem [#allocation4], %s1250
          %1252 = dma.done %s1249, 16
        $region52: #{tpu_custom_call.1} parent=43 // pred_fallthru
          _
      $region44: #{tpu_custom_call.1} parent=5 // pred_fallthru
        _
    $region6: #{tpu_custom_call.1} parent=1 // loop_footer
      %s21 = sadd.s32 1, %s17
    $region7: #{tpu_custom_call.1} parent=1 // loop_footer_branch
      %16 = sbr.rel target = $region3
    $region8: #{tpu_custom_call.1} parent=1 // loop_exit
      _
    %1253 = vsyncpa [#allocation3], 1
    %s1254 = scalar_lea.sflag [#allocation3], 1
    %1255 = vsyncpa %s1254, 1
    %1256 = vsyncpa [#allocation5], 1
    %s1257 = scalar_lea.sflag [#allocation5], 1
    %1258 = vsyncpa %s1257, 1

</llo_original>
